<compile_context>
chip_gen: v7x
topology: tpu7x:2x2x1
jax: 0.10.0
libtpu: 0.0.40
codegen_flags: <defaults>
</compile_context>

<pallas_src>
import jax
import jax.numpy as jnp
from jax.experimental import pallas as pl
from jax.experimental.pallas import tpu as pltpu

_TARGET_TILE_BYTES = 8 * 1024 * 1024   # ~8 MiB input tile (perf review)
_VMEM_LIMIT_BYTES = 48 * 1024 * 1024   # > 2x(8+8) MiB live, < v7x 64 MiB physical


def _linreg_kernel(params_ref, x_ref, o_ref):
    # params_ref: (1, 2) f32 in SMEM holding [w, b]; x_ref/o_ref: (tile_rows, lane) VMEM.
    w = params_ref[0, 0]
    b = params_ref[0, 1]
    wx = w * x_ref[...].astype(jnp.float32)
    o_ref[...] = (wx * wx + b).astype(o_ref.dtype)


def _pick_lane(total: int):
    """Widest lane-dense last dim that divides `total`; else 128 + aligned prefix."""
    for lane in (1024, 512, 256, 128):
        if total % lane == 0:
            return lane, total
    return 128, (total // 128) * 128


def _choose_tile_rows(n_rows: int, lane: int, itemsize: int, tile_bytes: int) -> int:
    """Sublane-aligned row tile so one input tile is ~tile_bytes."""
    rows = max(8, tile_bytes // (lane * itemsize))
    rows = min(int(rows), n_rows)
    if rows < n_rows:
        # Block second-to-last dim must be a multiple of 8 unless it spans the
        # full array extent.
        rows = max(8, (rows // 8) * 8)
    return rows


def linear_regression_forward(x: jax.Array,
                              weights: jax.Array,
                              bias: jax.Array,
                              *,
                              tile_bytes: int = _TARGET_TILE_BYTES) -> jax.Array:
    """Computes (weights * x)**2 + bias with the hot path in a Pallas kernel.

    x:       float array of any shape
    weights: float32 [1]   (scalar parameter, as in the PyTorch module)
    bias:    float32 [1]
    """
    orig_shape = x.shape
    total = int(x.size)
    itemsize = jnp.dtype(x.dtype).itemsize

    w32 = weights.astype(jnp.float32).reshape(-1)
    b32 = bias.astype(jnp.float32).reshape(-1)
    params = jnp.concatenate([w32, b32]).reshape(1, 2)

    x_flat = jnp.reshape(x, (-1,))
    lane, aligned = _pick_lane(total) if total > 0 else (128, 0)

    main_out = None
    if aligned > 0:
        x_main = x_flat if aligned == total else x_flat[:aligned]
        n_rows = aligned // lane
        x2d = jnp.reshape(x_main, (n_rows, lane))

        tile_rows = _choose_tile_rows(n_rows, lane, itemsize, tile_bytes)
        grid = (pl.cdiv(n_rows, tile_rows),)

        cost = pl.CostEstimate(
            flops=3 * aligned,                        # 2 mul + 1 add per element
            transcendentals=0,
            bytes_accessed=aligned * 2 * itemsize,    # one read + one write stream
        )

        out2d = pl.pallas_call(
            _linreg_kernel,
            out_shape=jax.ShapeDtypeStruct((n_rows, lane), x.dtype),
            grid=grid,
            in_specs=[
                pl.BlockSpec((1, 2), lambda i: (0, 0),
                             memory_space=pltpu.MemorySpace.SMEM),
                pl.BlockSpec((tile_rows, lane), lambda i: (i, 0)),
            ],
            out_specs=pl.BlockSpec((tile_rows, lane), lambda i: (i, 0)),
            compiler_params=pltpu.CompilerParams(
                dimension_semantics=("parallel",),
                vmem_limit_bytes=_VMEM_LIMIT_BYTES,
            ),
            cost_estimate=cost,
        )(params, x2d)
        main_out = jnp.reshape(out2d, (-1,))

    if aligned == total:
        out_flat = main_out if main_out is not None else x_flat  # total==0 degenerate
    else:
        # Tiny (<128 element) ragged tail handled in plain jnp — avoids the
        # full-array pad + slice round-trip on this bandwidth-bound op.
        tail = x_flat[aligned:]
        tail_out = ((w32[0] * tail.astype(jnp.float32)) ** 2 + b32[0]).astype(x.dtype)
        out_flat = tail_out if main_out is None else jnp.concatenate([main_out, tail_out])

    return jnp.reshape(out_flat, orig_shape)


if __name__ == "__main__":
    key = jax.random.PRNGKey(0)
    kx, kw, kb = jax.random.split(key, 3)

    # Deterministic "randn(1)" parameters (synthetic init, no checkpoint).
    weights = jax.random.normal(kw, (1,), dtype=jnp.float32)
    bias = jax.random.normal(kb, (1,), dtype=jnp.float32)

    # Case 1: lane-aligned input; small tile_bytes to force a multi-step,
    # software-pipelined grid even at this small test size.
    x1 = jax.random.normal(kx, (512, 128), dtype=jnp.float32)
    out1 = jax.block_until_ready(
        linear_regression_forward(x1, weights, bias, tile_bytes=64 * 1024))
    ref1 = (weights * x1) ** 2 + bias
    assert out1.shape == ref1.shape and out1.dtype == ref1.dtype
    assert jnp.allclose(out1, ref1, atol=1e-6, rtol=1e-6)

    # Case 2: lane-aligned input, default (production) tile size.
    out1b = jax.block_until_ready(linear_regression_forward(x1, weights, bias))
    assert jnp.allclose(out1b, ref1, atol=1e-6, rtol=1e-6)

    # Case 3: ragged, non-lane-aligned shape exercises the prefix + jnp-tail path.
    x2 = jax.random.normal(kx, (33, 7), dtype=jnp.float32)
    out2 = jax.block_until_ready(linear_regression_forward(x2, weights, bias))
    ref2 = (weights * x2) ** 2 + bias
    assert out2.shape == ref2.shape and out2.dtype == ref2.dtype
    assert jnp.allclose(out2, ref2, atol=1e-6, rtol=1e-6)

    # Case 4: classic linear-regression shape (N, 1), fully sub-lane sized
    # (entire array is the "tail"; no kernel launch needed).
    x3 = jax.random.normal(kx, (50, 1), dtype=jnp.float32)
    out3 = jax.block_until_ready(linear_regression_forward(x3, weights, bias))
    ref3 = (weights * x3) ** 2 + bias
    assert out3.shape == ref3.shape
    assert jnp.allclose(out3, ref3, atol=1e-6, rtol=1e-6)

    print("KERNEL_OK")
</pallas_src>

<mosaic_0001>
module attributes {stable_mosaic.version = 11 : i64} {
  func.func @_linreg_kernel(%arg0: i32, %arg1: memref<1x2xf32, #tpu.memory_space<smem>>, %arg2: memref<16x1024xf32, #tpu.memory_space<vmem>>, %arg3: memref<16x1024xf32, #tpu.memory_space<vmem>>) attributes {dimension_semantics = [#tpu.dimension_semantics<parallel>], iteration_bounds = array<i64: 4>, scalar_prefetch = 0 : i64, scratch_operands = 0 : i64, tpu.core_type = #tpu.core_type<tc>, window_params = [{transform_indices = @transform_0, window_bounds = array<i64: 1, 2>}, {transform_indices = @transform_1, window_bounds = array<i64: 16, 1024>}, {transform_indices = @transform_2, window_bounds = array<i64: 16, 1024>}]} {
    %c0 = arith.constant 0 : index
    %c0_0 = arith.constant 0 : index
    %0 = memref.load %arg1[%c0, %c0_0] : memref<1x2xf32, #tpu.memory_space<smem>>
    %c0_1 = arith.constant 0 : index
    %c1 = arith.constant 1 : index
    %1 = memref.load %arg1[%c0_1, %c1] : memref<1x2xf32, #tpu.memory_space<smem>>
    %c0_2 = arith.constant 0 : index
    %c0_3 = arith.constant 0 : index
    %2 = vector.load %arg2[%c0_2, %c0_3] : memref<16x1024xf32, #tpu.memory_space<vmem>>, vector<16x1024xf32>
    %3 = vector.broadcast %0 : f32 to vector<16x1024xf32>
    %4 = arith.mulf %3, %2 : vector<16x1024xf32>
    %5 = arith.mulf %4, %4 : vector<16x1024xf32>
    %6 = vector.broadcast %1 : f32 to vector<16x1024xf32>
    %7 = arith.addf %5, %6 : vector<16x1024xf32>
    %c0_4 = arith.constant 0 : index
    %c0_5 = arith.constant 0 : index
    %8 = vector.load %arg3[%c0_4, %c0_5] : memref<16x1024xf32, #tpu.memory_space<vmem>>, vector<16x1024xf32>
    tpu.vector_store %arg3[%c0_4, %c0_5], %7 {strides = array<i32>} : memref<16x1024xf32, #tpu.memory_space<vmem>>, vector<16x1024xf32>,
    return
  }
  func.func @transform_0(%arg0: i32) -> (i32, i32) {
    %c0_i32 = arith.constant 0 : i32
    %c0_i32_0 = arith.constant 0 : i32
    %c0_i32_1 = arith.constant 0 : i32
    return %c0_i32, %c0_i32_0 : i32, i32
  }
  func.func @transform_1(%arg0: i32) -> (i32, i32) {
    %c0_i32 = arith.constant 0 : i32
    %c0_i32_0 = arith.constant 0 : i32
    return %arg0, %c0_i32 : i32, i32
  }
  func.func @transform_2(%arg0: i32) -> (i32, i32) {
    %c0_i32 = arith.constant 0 : i32
    %c0_i32_0 = arith.constant 0 : i32
    return %arg0, %c0_i32 : i32, i32
  }
}

</mosaic_0001>

<llo_original>
// kernel: tpu_custom_call.1
$region0: #{tpu_custom_call.1}
  #allocation0 [shape = 'u32[]', space=smem, size = 0x4, offset = 0x4, fixed_abs, tag = 'smem constant byte address 0x4 - core index']
  #allocation1 [shape = 'u32[144,128]{1,0:T(1,128)}', space=vmem, size = 0x12000, scoped, tag = 'internal scratch']
  %s0 = inlined_call_operand.hbm [shape: f32[1,2], index: 0, kind: input, shape index: {}]
  %s1 = inlined_call_operand.hbm [shape: f32[64,1024], index: 1, kind: input, shape index: {}]
  %s2 = inlined_call_operand.hbm [shape: f32[64,1024], index: 2, kind: output, shape index: {}]
  %s3 = sld [smem:[#allocation0]]
  $region49: #{tpu_custom_call.1} parent=0
    _
  %s5 = ssub.s32 1, %s3
  %s6 = scalar_select 0, %s5, %s3
  $region1: #{tpu_custom_call.1} parent=0
    #allocation2 [shape = 'u8[512]{0}', space=smem, size = 0x200, scoped, tag = 'input window, operand 0, single buffered']
    #allocation3 [shape = 's32[2]{0}', space=sflag, size = 0x8, scoped, tag = 'scoped memory for tpu_custom_call.1']
    #allocation4 [shape = 's32[2]{0}', space=sflag, size = 0x8, scoped, tag = 'scoped memory for tpu_custom_call.1']
    #allocation5 [shape = 's32[2]{0}', space=sflag, size = 0x8, scoped, tag = 'scoped memory for tpu_custom_call.1']
    #allocation6 [shape = 'u8[131072]{0}', space=vmem, size = 0x20000, scoped, tag = 'input window, operand 1']
    #allocation7 [shape = 'u8[131072]{0}', space=vmem, size = 0x20000, scoped, tag = 'output window, operand 0']
    %7 = vsyncpa [#allocation5], 0
    %8 = vsyncpa [#allocation3], 0
    %s9 = scalar_lea.sflag [#allocation3], 1
    %10 = vsyncpa %s9, 0
    %11 = vsyncpa [#allocation4], 0
    %s12 = scalar_lea.sflag [#allocation4], 1
    %13 = vsyncpa %s12, 0
    loop: start=0, step=1, limit=6
    $region2: #{tpu_custom_call.1} parent=1 // loop_pre_header
      _
    $region3: #{tpu_custom_call.1} parent=1 // loop_header
      %s15 = sphi 0, %s19
      %p16 = scmp.ge.s32.totalorder %s15, 6
      %s23 = sphi 0, %s23
      %s25 = sphi 0, %s23
      %s26 = sphi 0, %s25
      %s40 = sphi 0, %s26
      %s46 = sphi 0, %s48
      %s49 = sphi 0, %s46
      %s50 = sphi 0, %s49
      %s66 = sphi 0, %s50
      %s72 = sphi 0, %s74
      %s75 = sphi 0, %s72
      %s76 = sphi 0, %s75
      %s92 = sphi 0, %s76
    $region4: #{tpu_custom_call.1} parent=1 // loop_header_branch
      %18 = sbr.rel (%p16) target = $region8
    $region5: #{tpu_custom_call.1} parent=1 // loop_body
      %s20 = ssub.s32 %s15, 1
      %s21 = ssub.s32 %s15, 2
      %s22 = sadd.s32 %s15, 1
      %s24 = sadd.s32 %s23, 1
      %p27 = scmp.eq.s32.totalorder %s15, 3
      %p28 = scmp.ne.s32.totalorder %s23, %s25
      %p29 = scmp.eq.s32.totalorder %s15, 0
      %p30 = por %p28, %p29
      %p31 = scmp.ne.s32.totalorder %s23, %s25
      %p32 = scmp.eq.s32.totalorder %s20, 3
      %p33 = por %p31, %p32
      %p34 = scmp.ne.s32.totalorder %s25, %s26
      %p35 = scmp.eq.s32.totalorder %s20, 0
      %p36 = por %p34, %p35
      %p37 = scmp.ne.s32.totalorder %s25, %s26
      %p38 = scmp.eq.s32.totalorder %s21, 3
      %p39 = por %p37, %p38
      %p41 = scmp.ne.s32.totalorder %s26, %s40
      %p42 = scmp.eq.s32.totalorder %s21, 0
      %p43 = por %p41, %p42
      %s44 = ssub.s32 %s15, %s22
      %p45 = scmp.eq.s32.totalorder %s44, 0
      %s47 = sadd.s32 %s46, 1
      %s48 = scalar_select %p45, %s46, %s47
      %p51 = pneg %p45
      %p52 = scmp.eq.s32.totalorder %s15, 3
      %p53 = por %p51, %p52
      %p54 = scmp.ne.s32.totalorder %s46, %s49
      %p55 = scmp.eq.s32.totalorder %s15, 0
      %p56 = por %p54, %p55
      %p57 = scmp.ne.s32.totalorder %s46, %s49
      %p58 = scmp.eq.s32.totalorder %s20, 3
      %p59 = por %p57, %p58
      %p60 = scmp.ne.s32.totalorder %s49, %s50
      %p61 = scmp.eq.s32.totalorder %s20, 0
      %p62 = por %p60, %p61
      %p63 = scmp.ne.s32.totalorder %s49, %s50
      %p64 = scmp.eq.s32.totalorder %s21, 3
      %p65 = por %p63, %p64
      %p67 = scmp.ne.s32.totalorder %s50, %s66
      %p68 = scmp.eq.s32.totalorder %s21, 0
      %p69 = por %p67, %p68
      %s70 = ssub.s32 %s15, %s22
      %p71 = scmp.eq.s32.totalorder %s70, 0
      %s73 = sadd.s32 %s72, 1
      %s74 = scalar_select %p71, %s72, %s73
      %p77 = pneg %p71
      %p78 = scmp.eq.s32.totalorder %s15, 3
      %p79 = por %p77, %p78
      %p80 = scmp.ne.s32.totalorder %s72, %s75
      %p81 = scmp.eq.s32.totalorder %s15, 0
      %p82 = por %p80, %p81
      %p83 = scmp.ne.s32.totalorder %s72, %s75
      %p84 = scmp.eq.s32.totalorder %s20, 3
      %p85 = por %p83, %p84
      %p86 = scmp.ne.s32.totalorder %s75, %s76
      %p87 = scmp.eq.s32.totalorder %s20, 0
      %p88 = por %p86, %p87
      %p89 = scmp.ne.s32.totalorder %s75, %s76
      %p90 = scmp.eq.s32.totalorder %s21, 3
      %p91 = por %p89, %p90
      %p93 = scmp.ne.s32.totalorder %s76, %s92
      %p94 = scmp.eq.s32.totalorder %s21, 0
      %p95 = por %p93, %p94
      %p96 = scmp.le.s32.totalorder 1, %s15
      %p97 = scmp.lt.s32.totalorder %s15, 5
      %p98 = pnand %p96, %p97
      %p99 = pneg %p98
      // Predicated region
      $region9: #{tpu_custom_call.1} parent=5 // pred_check
        _
      $region10: #{tpu_custom_call.1} parent=5 // pred_check_branch
        %101 = sbr.rel (%p98) target = $region12
      $region11: #{tpu_custom_call.1} parent=5 // pred_region
        %s102 = ssub.s32 %s15, 1
        // Predicated region
        $region13: #{tpu_custom_call.1} parent=11 // pred_check
          %p103 = pneg %p36
        $region14: #{tpu_custom_call.1} parent=11 // pred_check_branch
          %105 = sbr.rel (%p103) target = $region16
        $region15: #{tpu_custom_call.1} parent=11 // pred_region
          %s107 = ssub.s32 16, 16
          %108 = vsyncadd [#allocation5], %s107
          %111 = dma.hbm_to_smem %s0, 16, [#allocation2], [#allocation5]
        $region16: #{tpu_custom_call.1} parent=11 // pred_fallthru
          _
      $region12: #{tpu_custom_call.1} parent=5 // pred_fallthru
        _
      %p112 = scmp.lt.s32.totalorder %s15, 4
      // Predicated region
      $region17: #{tpu_custom_call.1} parent=5 // pred_check
        %p113 = pneg %p112
      $region18: #{tpu_custom_call.1} parent=5 // pred_check_branch
        %115 = sbr.rel (%p113) target = $region20
      $region19: #{tpu_custom_call.1} parent=5 // pred_region
        // Predicated region
        $region21: #{tpu_custom_call.1} parent=19 // pred_check
          %p116 = pneg %p56
        $region22: #{tpu_custom_call.1} parent=19 // pred_check_branch
          %118 = sbr.rel (%p116) target = $region24
        $region23: #{tpu_custom_call.1} parent=19 // pred_region
          %s119 = sand.u32 %s46, 1
          %s120 = scalar_lea.sflag [#allocation3], %s119
          %s121 = sand.u32 %s46, 1
          %s122 = smul.addr %s121, 128
          %s123 = scalar_lea.vmem [#allocation6], %s122
          %s124 = smul.u32 2, %s15
          %s126 = ssub.s32 2048, 2048
          %127 = vsyncadd %s120, %s126
          %s128 = smul.addr %s124, 8
          %s129 = smul.addr %s128, 128
          %s130 = scalar_lea.hbm %s1, %s129
          %s131 = sshll.u32 %s123, 4
          %s132 = int_to_ptr.vmem [resolvable:$true] %s131
          %137 = dma.hbm_to_vmem [thread:$0]  %s130, 2048, %s132, %s120, 1024, 1024, 64
        $region24: #{tpu_custom_call.1} parent=19 // pred_fallthru
          _
      $region20: #{tpu_custom_call.1} parent=5 // pred_fallthru
        _
      %p138 = scmp.le.s32.totalorder 1, %s15
      %p139 = scmp.lt.s32.totalorder %s15, 5
      %p140 = pnand %p138, %p139
      %p141 = pneg %p140
      // Predicated region
      $region25: #{tpu_custom_call.1} parent=5 // pred_check
        _
      $region26: #{tpu_custom_call.1} parent=5 // pred_check_branch
        %143 = sbr.rel (%p140) target = $region28
      $region27: #{tpu_custom_call.1} parent=5 // pred_region
        %s144 = ssub.s32 %s15, 1
        // Predicated region
        $region29: #{tpu_custom_call.1} parent=27 // pred_check
          %p145 = pneg %p36
        $region30: #{tpu_custom_call.1} parent=27 // pred_check_branch
          %147 = sbr.rel (%p145) target = $region32
        $region31: #{tpu_custom_call.1} parent=27 // pred_region
          %148 = dma.done [#allocation5], 16
        $region32: #{tpu_custom_call.1} parent=27 // pred_fallthru
          _
        %s149 = sand.u32 %s49, 1
        %s150 = scalar_lea.sflag [#allocation3], %s149
        %s151 = sand.u32 %s49, 1
        %s152 = smul.addr %s151, 128
        %s153 = scalar_lea.vmem [#allocation6], %s152
        // Predicated region
        $region33: #{tpu_custom_call.1} parent=27 // pred_check
          %p154 = pneg %p62
        $region34: #{tpu_custom_call.1} parent=27 // pred_check_branch
          %156 = sbr.rel (%p154) target = $region36
        $region35: #{tpu_custom_call.1} parent=27 // pred_region
          %157 = dma.done %s150, 2048
        $region36: #{tpu_custom_call.1} parent=27 // pred_fallthru
          _
        %158 = sfence
        %p159 = pneg %p36
        %p160 = pneg %p33
        %s161 = sand.u32 %s49, 1
        %s162 = scalar_lea.sflag [#allocation3], %s161
        %s163 = sand.u32 %s49, 1
        %s164 = smul.addr %s163, 128
        %s165 = scalar_lea.vmem [#allocation6], %s164
        %p166 = pneg %p62
        %p167 = pneg %p59
        %p168 = pneg %p88
        %p169 = pneg %p85
        %s170 = sand.u32 %s75, 1
        %s171 = scalar_lea.sflag [#allocation4], %s170
        %s172 = sand.u32 %s75, 1
        %s173 = smul.addr %s172, 128
        %s174 = scalar_lea.vmem [#allocation7], %s173
        %s175 = smul.u32 2, %s20
        %s176 = smul.u32 2, %s20
        %s177 = sld [smem:[#allocation2]]
        %s178 = sld [smem:[#allocation2 + $0x1]]
        %v179 = vld [vmem:[%s153] sm:$0xff]
        %v180 = vld [vmem:[%s153 + $0x8] sm:$0xff]
        %v181 = vld [vmem:[%s153 + $0x10] sm:$0xff]
        %v182 = vld [vmem:[%s153 + $0x18] sm:$0xff]
        %v183 = vld [vmem:[%s153 + $0x20] sm:$0xff]
        %v184 = vld [vmem:[%s153 + $0x28] sm:$0xff]
        %v185 = vld [vmem:[%s153 + $0x30] sm:$0xff]
        %v186 = vld [vmem:[%s153 + $0x38] sm:$0xff]
        %v187 = vld [vmem:[%s153 + $0x40] sm:$0xff]
        %v188 = vld [vmem:[%s153 + $0x48] sm:$0xff]
        %v189 = vld [vmem:[%s153 + $0x50] sm:$0xff]
        %v190 = vld [vmem:[%s153 + $0x58] sm:$0xff]
        %v191 = vld [vmem:[%s153 + $0x60] sm:$0xff]
        %v192 = vld [vmem:[%s153 + $0x68] sm:$0xff]
        %v193 = vld [vmem:[%s153 + $0x70] sm:$0xff]
        %v194 = vld [vmem:[%s153 + $0x78] sm:$0xff]
        %v195 = vstv %s177
        %v196 = vmul.f32 %v195, %v179
        %v197 = vmul.f32 %v195, %v180
        %v198 = vmul.f32 %v195, %v181
        %v199 = vmul.f32 %v195, %v182
        %v200 = vmul.f32 %v195, %v183
        %v201 = vmul.f32 %v195, %v184
        %v202 = vmul.f32 %v195, %v185
        %v203 = vmul.f32 %v195, %v186
        %v204 = vmul.f32 %v195, %v187
        %v205 = vmul.f32 %v195, %v188
        %v206 = vmul.f32 %v195, %v189
        %v207 = vmul.f32 %v195, %v190
        %v208 = vmul.f32 %v195, %v191
        %v209 = vmul.f32 %v195, %v192
        %v210 = vmul.f32 %v195, %v193
        %v211 = vmul.f32 %v195, %v194
        %v212 = vmul.f32 %v196, %v196
        %v213 = vmul.f32 %v197, %v197
        %v214 = vmul.f32 %v198, %v198
        %v215 = vmul.f32 %v199, %v199
        %v216 = vmul.f32 %v200, %v200
        %v217 = vmul.f32 %v201, %v201
        %v218 = vmul.f32 %v202, %v202
        %v219 = vmul.f32 %v203, %v203
        %v220 = vmul.f32 %v204, %v204
        %v221 = vmul.f32 %v205, %v205
        %v222 = vmul.f32 %v206, %v206
        %v223 = vmul.f32 %v207, %v207
        %v224 = vmul.f32 %v208, %v208
        %v225 = vmul.f32 %v209, %v209
        %v226 = vmul.f32 %v210, %v210
        %v227 = vmul.f32 %v211, %v211
        %v228 = vstv %s178
        %v229 = vadd.f32 %v212, %v228
        %v230 = vadd.f32 %v213, %v228
        %v231 = vadd.f32 %v214, %v228
        %v232 = vadd.f32 %v215, %v228
        %v233 = vadd.f32 %v216, %v228
        %v234 = vadd.f32 %v217, %v228
        %v235 = vadd.f32 %v218, %v228
        %v236 = vadd.f32 %v219, %v228
        %v237 = vadd.f32 %v220, %v228
        %v238 = vadd.f32 %v221, %v228
        %v239 = vadd.f32 %v222, %v228
        %v240 = vadd.f32 %v223, %v228
        %v241 = vadd.f32 %v224, %v228
        %v242 = vadd.f32 %v225, %v228
        %v243 = vadd.f32 %v226, %v228
        %v244 = vadd.f32 %v227, %v228
        %245 = vst [vmem:[%s174] sm:$0xff] %v229
        %246 = vst [vmem:[%s174 + $0x8] sm:$0xff] %v230
        %247 = vst [vmem:[%s174 + $0x10] sm:$0xff] %v231
        %248 = vst [vmem:[%s174 + $0x18] sm:$0xff] %v232
        %249 = vst [vmem:[%s174 + $0x20] sm:$0xff] %v233
        %250 = vst [vmem:[%s174 + $0x28] sm:$0xff] %v234
        %251 = vst [vmem:[%s174 + $0x30] sm:$0xff] %v235
        %252 = vst [vmem:[%s174 + $0x38] sm:$0xff] %v236
        %253 = vst [vmem:[%s174 + $0x40] sm:$0xff] %v237
        %254 = vst [vmem:[%s174 + $0x48] sm:$0xff] %v238
        %255 = vst [vmem:[%s174 + $0x50] sm:$0xff] %v239
        %256 = vst [vmem:[%s174 + $0x58] sm:$0xff] %v240
        %257 = vst [vmem:[%s174 + $0x60] sm:$0xff] %v241
        %258 = vst [vmem:[%s174 + $0x68] sm:$0xff] %v242
        %259 = vst [vmem:[%s174 + $0x70] sm:$0xff] %v243
        %260 = vst [vmem:[%s174 + $0x78] sm:$0xff] %v244
        %s261 = sand.u32 %s75, 1
        %s262 = scalar_lea.sflag [#allocation4], %s261
        %s263 = sand.u32 %s75, 1
        %s264 = smul.addr %s263, 128
        %s265 = scalar_lea.vmem [#allocation7], %s264
        // Predicated region
        $region37: #{tpu_custom_call.1} parent=27 // pred_check
          %p266 = pneg %p85
        $region38: #{tpu_custom_call.1} parent=27 // pred_check_branch
          %268 = sbr.rel (%p266) target = $region40
        $region39: #{tpu_custom_call.1} parent=27 // pred_region
          %s269 = smul.u32 2, %s20
          %s271 = ssub.s32 2048, 2048
          %272 = vsyncadd %s262, %s271
          %s273 = smul.addr %s269, 8
          %s274 = smul.addr %s273, 128
          %s275 = scalar_lea.hbm %s2, %s274
          %s276 = sshll.u32 %s265, 4
          %s277 = int_to_ptr.vmem [resolvable:$true] %s276
          %282 = dma.vmem_to_hbm [thread:$0]  %s277, 2048, %s275, %s262, 1024, 1024, 64
        $region40: #{tpu_custom_call.1} parent=27 // pred_fallthru
          _
      $region28: #{tpu_custom_call.1} parent=5 // pred_fallthru
        _
      %p283 = scmp.le.s32.totalorder 2, %s15
      // Predicated region
      $region41: #{tpu_custom_call.1} parent=5 // pred_check
        %p284 = pneg %p283
      $region42: #{tpu_custom_call.1} parent=5 // pred_check_branch
        %286 = sbr.rel (%p284) target = $region44
      $region43: #{tpu_custom_call.1} parent=5 // pred_region
        %s287 = ssub.s32 %s15, 2
        // Predicated region
        $region45: #{tpu_custom_call.1} parent=43 // pred_check
          %p288 = pneg %p91
        $region46: #{tpu_custom_call.1} parent=43 // pred_check_branch
          %290 = sbr.rel (%p288) target = $region48
        $region47: #{tpu_custom_call.1} parent=43 // pred_region
          %s291 = sand.u32 %s76, 1
          %s292 = scalar_lea.sflag [#allocation4], %s291
          %s293 = sand.u32 %s76, 1
          %s294 = smul.addr %s293, 128
          %s295 = scalar_lea.vmem [#allocation7], %s294
          %296 = dma.done %s292, 2048
        $region48: #{tpu_custom_call.1} parent=43 // pred_fallthru
          _
      $region44: #{tpu_custom_call.1} parent=5 // pred_fallthru
        _
    $region6: #{tpu_custom_call.1} parent=1 // loop_footer
      %s19 = sadd.s32 1, %s15
    $region7: #{tpu_custom_call.1} parent=1 // loop_footer_branch
      %14 = sbr.rel target = $region3
    $region8: #{tpu_custom_call.1} parent=1 // loop_exit
      _
    %297 = vsyncpa [#allocation3], 1
    %s298 = scalar_lea.sflag [#allocation3], 1
    %299 = vsyncpa %s298, 1
    %300 = vsyncpa [#allocation4], 1
    %s301 = scalar_lea.sflag [#allocation4], 1
    %302 = vsyncpa %s301, 1
    %303 = vsyncpa [#allocation5], 1
    %s304 = scalar_lea.sflag [#allocation5], 1
    %305 = vsyncpa %s304, 1

</llo_original>
